<compile_context>
chip_gen: v7x
topology: tpu7x:2x2x1
jax: 0.10.0
libtpu: 0.0.40
codegen_flags: <defaults>
</compile_context>

<pallas_src>
import functools

import jax
import jax.numpy as jnp
from jax.experimental import pallas as pl
from jax.experimental.pallas import tpu as pltpu


def _upsample_kernel(x_ref, uwT_ref, o_ref):
    # x_ref: (Rb, W), uwT_ref: (W, 2W), o_ref: (Rb, 4W)
    w2 = o_ref.shape[-1] // 2
    # Column interleave on the MXU: tmp[r, 2w+b] = x[r, w]
    tmp = jnp.dot(
        x_ref[...], uwT_ref[...], preferred_element_type=jnp.float32
    ).astype(o_ref.dtype)
    # Row duplication via the free (R, 4W) -> (..., 2H, 2W) reshape in the
    # wrapper: halves of the last dim become output rows 2h and 2h+1.
    o_ref[:, :w2] = tmp
    o_ref[:, w2:] = tmp


def _pick_row_block(R, W, dsize, target_out_bytes=2 << 20):
    """Row-block so the output tile is ~2 MiB (sublane-aligned, multiple of 8)."""
    row_out_bytes = 4 * W * dsize
    rb = max(8, (target_out_bytes // row_out_bytes) // 8 * 8)
    if rb >= R:
        return R  # single block == full extent (always a legal block shape)
    return int(rb)


@functools.partial(jax.jit, static_argnums=())
def my_upsample(x):
    """Pallas TPU implementation of myUpsample.forward (2x nearest upsample, NCHW)."""
    N, C, H, W = x.shape
    dsize = jnp.dtype(x.dtype).itemsize
    R = N * C * H

    # Free row-major reshape: every input row is one (H-row of one plane).
    x2 = x.reshape(R, W)

    # One-hot column-duplication matrix, pre-transposed, in the input dtype:
    # uwT[w, 2w] = uwT[w, 2w+1] = 1.
    uwT = (jnp.arange(W)[:, None] == (jnp.arange(2 * W) // 2)[None, :]).astype(x.dtype)

    rb = _pick_row_block(R, W, dsize)
    grid = (pl.cdiv(R, rb),)

    out2 = pl.pallas_call(
        _upsample_kernel,
        out_shape=jax.ShapeDtypeStruct((R, 4 * W), x.dtype),
        grid_spec=pltpu.PrefetchScalarGridSpec(
            num_scalar_prefetch=0,
            grid=grid,
            in_specs=[
                pl.BlockSpec((rb, W), lambda i: (i, 0)),
                pl.BlockSpec((W, 2 * W), lambda i: (0, 0)),  # same every step
            ],
            out_specs=pl.BlockSpec((rb, 4 * W), lambda i: (i, 0)),
        ),
        compiler_params=pltpu.CompilerParams(
            dimension_semantics=("parallel",),
            vmem_limit_bytes=32 * 1024 * 1024,
        ),
        cost_estimate=pl.CostEstimate(
            flops=2 * R * W * (2 * W),      # MXU work for the one-hot matmul
            transcendentals=0,
            bytes_accessed=5 * R * W * dsize,  # read 1x, write 4x
        ),
    )(x2, uwT)

    # Free row-major reshape: (N*C*H, 4W) -> (N, C, 2H, 2W) turns the two
    # 2W-halves of each row into the interleaved output rows 2h / 2h+1.
    return out2.reshape(N, C, 2 * H, 2 * W)


if __name__ == "__main__":
    key = jax.random.PRNGKey(0)
    N, C, H, W = 2, 4, 16, 16
    x = jax.random.normal(key, (N, C, H, W), dtype=jnp.float32)

    y = jax.block_until_ready(my_upsample(x))

    # Reference: pure-JAX equivalent of the PyTorch expand+reshape.
    ref = jnp.repeat(jnp.repeat(x, 2, axis=2), 2, axis=3)

    assert y.shape == (N, C, 2 * H, 2 * W), y.shape
    assert y.dtype == x.dtype, y.dtype
    assert jnp.allclose(y, ref), "mismatch vs reference nearest upsample"

    print("KERNEL_OK")
</pallas_src>

<mosaic_0001>
module attributes {stable_mosaic.version = 11 : i64} {
  func.func @_upsample_kernel(%arg0: i32, %arg1: memref<128x16xf32, #tpu.memory_space<vmem>>, %arg2: memref<16x32xf32, #tpu.memory_space<vmem>>, %arg3: memref<128x64xf32, #tpu.memory_space<vmem>>) attributes {dimension_semantics = [#tpu.dimension_semantics<parallel>], iteration_bounds = array<i64: 1>, scalar_prefetch = 0 : i64, scratch_operands = 0 : i64, tpu.core_type = #tpu.core_type<tc>, window_params = [{transform_indices = @transform_0, window_bounds = array<i64: 128, 16>}, {pipeline_mode = #tpu.pipeline_mode<synchronous>, transform_indices = @transform_1, window_bounds = array<i64: 16, 32>}, {transform_indices = @transform_2, window_bounds = array<i64: 128, 64>}]} {
    %c0 = arith.constant 0 : index
    %c0_0 = arith.constant 0 : index
    %0 = vector.load %arg1[%c0, %c0_0] : memref<128x16xf32, #tpu.memory_space<vmem>>, vector<128x16xf32>
    %c0_1 = arith.constant 0 : index
    %c0_2 = arith.constant 0 : index
    %1 = vector.load %arg2[%c0_1, %c0_2] : memref<16x32xf32, #tpu.memory_space<vmem>>, vector<16x32xf32>
    %cst = arith.constant dense<0.000000e+00> : vector<128x32xf32>
    %2 = tpu.matmul %0, %1, %cst {dimension_numbers = #tpu.dot_dimension_numbers<[1], [0], [0], [1], [0, 0, 1, 1], [], []>} : vector<128x16xf32>, vector<16x32xf32>, vector<128x32xf32> -> vector<128x32xf32>
    %c0_3 = arith.constant 0 : index
    %c0_4 = arith.constant 0 : index
    %3 = vector.load %arg3[%c0_3, %c0_4] : memref<128x64xf32, #tpu.memory_space<vmem>>, vector<128x32xf32>
    tpu.vector_store %arg3[%c0_3, %c0_4], %2 {strides = array<i32>} : memref<128x64xf32, #tpu.memory_space<vmem>>, vector<128x32xf32>,
    %c0_5 = arith.constant 0 : index
    %c32 = arith.constant 32 : index
    %4 = vector.load %arg3[%c0_5, %c32] : memref<128x64xf32, #tpu.memory_space<vmem>>, vector<128x32xf32>
    tpu.vector_store %arg3[%c0_5, %c32], %2 {strides = array<i32>} : memref<128x64xf32, #tpu.memory_space<vmem>>, vector<128x32xf32>,
    return
  }
  func.func @transform_0(%arg0: i32) -> (i32, i32) {
    %c0_i32 = arith.constant 0 : i32
    %c0_i32_0 = arith.constant 0 : i32
    return %arg0, %c0_i32 : i32, i32
  }
  func.func @transform_1(%arg0: i32) -> (i32, i32) {
    %c0_i32 = arith.constant 0 : i32
    %c0_i32_0 = arith.constant 0 : i32
    %c0_i32_1 = arith.constant 0 : i32
    return %c0_i32, %c0_i32_0 : i32, i32
  }
  func.func @transform_2(%arg0: i32) -> (i32, i32) {
    %c0_i32 = arith.constant 0 : i32
    %c0_i32_0 = arith.constant 0 : i32
    return %arg0, %c0_i32 : i32, i32
  }
}

</mosaic_0001>

<llo_original>
// kernel: my_upsample.1
$region0: #{my_upsample.1}
  #allocation0 [shape = 'u32[]', space=smem, size = 0x4, offset = 0x4, fixed_abs, tag = 'smem constant byte address 0x4 - core index']
  #allocation1 [shape = 'u32[144,128]{1,0:T(1,128)}', space=vmem, size = 0x12000, scoped, tag = 'internal scratch']
  %s0 = inlined_call_operand.hbm [shape: f32[128,16], index: 0, kind: input, shape index: {}]
  %s1 = inlined_call_operand.vmem [shape: f32[16,32], index: 1, kind: input, shape index: {}]
  %s2 = inlined_call_operand.vmem [shape: f32[128,64], index: 2, kind: output, shape index: {}]
  %s3 = sld [smem:[#allocation0]]
  $region22: #{my_upsample.1} parent=0
    _
  %s5 = ssub.s32 1, %s3
  %s6 = scalar_select 0, %s5, %s3
  $region1: #{my_upsample.1} parent=0
    #allocation2 [shape = 'u8[65536]{0}', space=vmem, size = 0x10000, scoped, tag = 'input window, operand 0, single buffered']
    #allocation3 [shape = 's32[1]{0}', space=sflag, size = 0x4, scoped, tag = 'scoped memory for my_upsample.1']
    %7 = vsyncpa [#allocation3], 0
    // Predicated region
    $region2: #{my_upsample.1} parent=1 // pred_check
      _
    $region3: #{my_upsample.1} parent=1 // pred_check_branch
      %9 = sbr.rel (0) target = $region5
    $region4: #{my_upsample.1} parent=1 // pred_region
      %s11 = ssub.s32 2048, 2048
      %12 = vsyncadd [#allocation3], %s11
      %s13 = sshll.u32 [#allocation2], 4
      %s14 = int_to_ptr.vmem [resolvable:$true] %s13
      %19 = dma.hbm_to_vmem [thread:$0]  %s0, 2048, %s14, [#allocation3], 128, 128, 8
    $region5: #{my_upsample.1} parent=1 // pred_fallthru
      _
    // Predicated region
    $region6: #{my_upsample.1} parent=1 // pred_check
      _
    $region7: #{my_upsample.1} parent=1 // pred_check_branch
      %21 = sbr.rel (0) target = $region9
    $region8: #{my_upsample.1} parent=1 // pred_region
      _
    $region9: #{my_upsample.1} parent=1 // pred_fallthru
      _
    // Predicated region
    $region10: #{my_upsample.1} parent=1 // pred_check
      _
    $region11: #{my_upsample.1} parent=1 // pred_check_branch
      %23 = sbr.rel (0) target = $region13
    $region12: #{my_upsample.1} parent=1 // pred_region
      %24 = dma.done [#allocation3], 2048
    $region13: #{my_upsample.1} parent=1 // pred_fallthru
      _
    %v25 = vld [vmem:[#allocation2] sm:$0xff]
    %v26 = vld [vmem:[#allocation2 + $0x8] sm:$0xff]
    %v27 = vld [vmem:[#allocation2 + $0x10] sm:$0xff]
    %v28 = vld [vmem:[#allocation2 + $0x18] sm:$0xff]
    %v29 = vld [vmem:[#allocation2 + $0x20] sm:$0xff]
    %v30 = vld [vmem:[#allocation2 + $0x28] sm:$0xff]
    %v31 = vld [vmem:[#allocation2 + $0x30] sm:$0xff]
    %v32 = vld [vmem:[#allocation2 + $0x38] sm:$0xff]
    %v33 = vld [vmem:[#allocation2 + $0x40] sm:$0xff]
    %v34 = vld [vmem:[#allocation2 + $0x48] sm:$0xff]
    %v35 = vld [vmem:[#allocation2 + $0x50] sm:$0xff]
    %v36 = vld [vmem:[#allocation2 + $0x58] sm:$0xff]
    %v37 = vld [vmem:[#allocation2 + $0x60] sm:$0xff]
    %v38 = vld [vmem:[#allocation2 + $0x68] sm:$0xff]
    %v39 = vld [vmem:[#allocation2 + $0x70] sm:$0xff]
    %v40 = vld [vmem:[#allocation2 + $0x78] sm:$0xff]
    %v41 = vld [vmem:[%s1] sm:$0xff]
    %v42 = vld [vmem:[%s1 + $0x8] sm:$0xff]
    %vm43 = vcmask 130048
    %v45 = vsel %vm43, %v25, 0
    %v48 = vsel %vm43, %v26, 0
    %v51 = vsel %vm43, %v27, 0
    %v54 = vsel %vm43, %v28, 0
    %v57 = vsel %vm43, %v29, 0
    %v60 = vsel %vm43, %v30, 0
    %v63 = vsel %vm43, %v31, 0
    %v66 = vsel %vm43, %v32, 0
    %v69 = vsel %vm43, %v33, 0
    %v72 = vsel %vm43, %v34, 0
    %v75 = vsel %vm43, %v35, 0
    %v78 = vsel %vm43, %v36, 0
    %v81 = vsel %vm43, %v37, 0
    %v84 = vsel %vm43, %v38, 0
    %v87 = vsel %vm43, %v39, 0
    %v90 = vsel %vm43, %v40, 0
    %92 = vmatprep.subr.mxu0 0.0
    %93 = vmatpush1.msra.mxu0 %v41
    %94 = vmatprep.subr.mxu0 0.0
    %95 = vmatpush1.msra.mxu0 %v42
    %96 = vmatprep.subr.mxu0 0.0
    %97 = vmatpush1.msra.mxu0 0.0
    %98 = vmatprep.subr.mxu0 0.0
    %99 = vmatpush1.msra.mxu0 0.0
    %100 = vmatprep.subr.mxu0 0.0
    %101 = vmatpush1.msra.mxu0 0.0
    %102 = vmatprep.subr.mxu0 0.0
    %103 = vmatpush1.msra.mxu0 0.0
    %104 = vmatprep.subr.mxu0 0.0
    %105 = vmatpush1.msra.mxu0 0.0
    %106 = vmatprep.subr.mxu0 0.0
    %107 = vmatpush1.msra.mxu0 0.0
    %108 = vmatprep.subr.mxu0 0.0
    %109 = vmatpush1.msra.mxu0 0.0
    %110 = vmatprep.subr.mxu0 0.0
    %111 = vmatpush1.msra.mxu0 0.0
    %112 = vmatprep.subr.mxu0 0.0
    %113 = vmatpush1.msra.mxu0 0.0
    %114 = vmatprep.subr.mxu0 0.0
    %115 = vmatpush1.msra.mxu0 0.0
    %116 = vmatprep.subr.mxu0 0.0
    %117 = vmatpush1.msra.mxu0 0.0
    %118 = vmatprep.subr.mxu0 0.0
    %119 = vmatpush1.msra.mxu0 0.0
    %120 = vmatprep.subr.mxu0 0.0
    %121 = vmatpush1.msra.mxu0 0.0
    %122 = vmatprep.subr.mxu0 0.0
    %123 = vmatpush1.msra.mxu0 0.0
    %124 = vmatprep.subr.mxu0 0.0
    %125 = vmatpush1.msra.mxu0 0.0
    %126 = vmatprep.subr.mxu0 0.0
    %127 = vmatpush1.msra.mxu0 0.0
    %128 = vmatprep.subr.mxu0 0.0
    %129 = vmatpush1.msra.mxu0 0.0
    %130 = vmatprep.subr.mxu0 0.0
    %131 = vmatpush1.msra.mxu0 0.0
    %132 = vmatprep.subr.mxu0 0.0
    %133 = vmatpush1.msra.mxu0 0.0
    %134 = vmatprep.subr.mxu0 0.0
    %135 = vmatpush1.msra.mxu0 0.0
    %136 = vmatprep.subr.mxu0 0.0
    %137 = vmatpush1.msra.mxu0 0.0
    %138 = vmatprep.subr.mxu0 0.0
    %139 = vmatpush1.msra.mxu0 0.0
    %140 = vmatprep.subr.mxu0 0.0
    %141 = vmatpush1.msra.mxu0 0.0
    %142 = vmatprep.subr.mxu0 0.0
    %143 = vmatpush1.msra.mxu0 0.0
    %144 = vmatprep.subr.mxu0 0.0
    %145 = vmatpush1.msra.mxu0 0.0
    %146 = vmatprep.subr.mxu0 0.0
    %147 = vmatpush1.msra.mxu0 0.0
    %148 = vmatprep.subr.mxu0 0.0
    %149 = vmatpush1.msra.mxu0 0.0
    %150 = vmatprep.subr.mxu0 0.0
    %151 = vmatpush1.msra.mxu0 0.0
    %152 = vmatprep.subr.mxu0 0.0
    %153 = vmatpush1.msra.mxu0 0.0
    %154 = vmatprep.subr.mxu0 0.0
    %155 = vmatpush1.msra.mxu0 0.0
    %156 = vmatprep.mubr.f32.mxu0 0.0
    %157 = vmatmul.mubr.f32.gmra.mrb[0].mxu0 %v45
    %v158 = vpop.f32.mrb[0].mxu0
    %v159 = vadd.f32 0.0, %v158
    %v160 = vpop.f32.mrb[0].mxu0
    %161 = vmatprep.mubr.f32.mxu0 0.0
    %162 = vmatmul.mubr.f32.gmra.mrb[0].mxu0 %v48
    %v163 = vpop.f32.mrb[0].mxu0
    %v164 = vadd.f32 0.0, %v163
    %v165 = vpop.f32.mrb[0].mxu0
    %166 = vmatprep.mubr.f32.mxu0 0.0
    %167 = vmatmul.mubr.f32.gmra.mrb[0].mxu0 %v51
    %v168 = vpop.f32.mrb[0].mxu0
    %v169 = vadd.f32 0.0, %v168
    %v170 = vpop.f32.mrb[0].mxu0
    %171 = vmatprep.mubr.f32.mxu0 0.0
    %172 = vmatmul.mubr.f32.gmra.mrb[0].mxu0 %v54
    %v173 = vpop.f32.mrb[0].mxu0
    %v174 = vadd.f32 0.0, %v173
    %v175 = vpop.f32.mrb[0].mxu0
    %176 = vmatprep.mubr.f32.mxu0 0.0
    %177 = vmatmul.mubr.f32.gmra.mrb[0].mxu0 %v57
    %v178 = vpop.f32.mrb[0].mxu0
    %v179 = vadd.f32 0.0, %v178
    %v180 = vpop.f32.mrb[0].mxu0
    %181 = vmatprep.mubr.f32.mxu0 0.0
    %182 = vmatmul.mubr.f32.gmra.mrb[0].mxu0 %v60
    %v183 = vpop.f32.mrb[0].mxu0
    %v184 = vadd.f32 0.0, %v183
    %v185 = vpop.f32.mrb[0].mxu0
    %186 = vmatprep.mubr.f32.mxu0 0.0
    %187 = vmatmul.mubr.f32.gmra.mrb[0].mxu0 %v63
    %v188 = vpop.f32.mrb[0].mxu0
    %v189 = vadd.f32 0.0, %v188
    %v190 = vpop.f32.mrb[0].mxu0
    %191 = vmatprep.mubr.f32.mxu0 0.0
    %192 = vmatmul.mubr.f32.gmra.mrb[0].mxu0 %v66
    %v193 = vpop.f32.mrb[0].mxu0
    %v194 = vadd.f32 0.0, %v193
    %v195 = vpop.f32.mrb[0].mxu0
    %196 = vmatprep.mubr.f32.mxu0 0.0
    %197 = vmatmul.mubr.f32.gmra.mrb[0].mxu0 %v69
    %v198 = vpop.f32.mrb[0].mxu0
    %v199 = vadd.f32 0.0, %v198
    %v200 = vpop.f32.mrb[0].mxu0
    %201 = vmatprep.mubr.f32.mxu0 0.0
    %202 = vmatmul.mubr.f32.gmra.mrb[0].mxu0 %v72
    %v203 = vpop.f32.mrb[0].mxu0
    %v204 = vadd.f32 0.0, %v203
    %v205 = vpop.f32.mrb[0].mxu0
    %206 = vmatprep.mubr.f32.mxu0 0.0
    %207 = vmatmul.mubr.f32.gmra.mrb[0].mxu0 %v75
    %v208 = vpop.f32.mrb[0].mxu0
    %v209 = vadd.f32 0.0, %v208
    %v210 = vpop.f32.mrb[0].mxu0
    %211 = vmatprep.mubr.f32.mxu0 0.0
    %212 = vmatmul.mubr.f32.gmra.mrb[0].mxu0 %v78
    %v213 = vpop.f32.mrb[0].mxu0
    %v214 = vadd.f32 0.0, %v213
    %v215 = vpop.f32.mrb[0].mxu0
    %216 = vmatprep.mubr.f32.mxu0 0.0
    %217 = vmatmul.mubr.f32.gmra.mrb[0].mxu0 %v81
    %v218 = vpop.f32.mrb[0].mxu0
    %v219 = vadd.f32 0.0, %v218
    %v220 = vpop.f32.mrb[0].mxu0
    %221 = vmatprep.mubr.f32.mxu0 0.0
    %222 = vmatmul.mubr.f32.gmra.mrb[0].mxu0 %v84
    %v223 = vpop.f32.mrb[0].mxu0
    %v224 = vadd.f32 0.0, %v223
    %v225 = vpop.f32.mrb[0].mxu0
    %226 = vmatprep.mubr.f32.mxu0 0.0
    %227 = vmatmul.mubr.f32.gmra.mrb[0].mxu0 %v87
    %v228 = vpop.f32.mrb[0].mxu0
    %v229 = vadd.f32 0.0, %v228
    %v230 = vpop.f32.mrb[0].mxu0
    %231 = vmatprep.mubr.f32.mxu0 0.0
    %232 = vmatmul.mubr.f32.gmra.mrb[0].mxu0 %v90
    %v233 = vpop.f32.mrb[0].mxu0
    %v234 = vadd.f32 0.0, %v233
    %v235 = vpop.f32.mrb[0].mxu0
    %236 = vdwg.mxu0
    %vm237 = vcmask 261120
    %238 = vst.msk [vmem:[%s2] sm:$0xff] %vm237, %v159
    %239 = vst.msk [vmem:[%s2 + $0x8] sm:$0xff] %vm237, %v164
    %240 = vst.msk [vmem:[%s2 + $0x10] sm:$0xff] %vm237, %v169
    %241 = vst.msk [vmem:[%s2 + $0x18] sm:$0xff] %vm237, %v174
    %242 = vst.msk [vmem:[%s2 + $0x20] sm:$0xff] %vm237, %v179
    %243 = vst.msk [vmem:[%s2 + $0x28] sm:$0xff] %vm237, %v184
    %244 = vst.msk [vmem:[%s2 + $0x30] sm:$0xff] %vm237, %v189
    %245 = vst.msk [vmem:[%s2 + $0x38] sm:$0xff] %vm237, %v194
    %246 = vst.msk [vmem:[%s2 + $0x40] sm:$0xff] %vm237, %v199
    %247 = vst.msk [vmem:[%s2 + $0x48] sm:$0xff] %vm237, %v204
    %248 = vst.msk [vmem:[%s2 + $0x50] sm:$0xff] %vm237, %v209
    %249 = vst.msk [vmem:[%s2 + $0x58] sm:$0xff] %vm237, %v214
    %250 = vst.msk [vmem:[%s2 + $0x60] sm:$0xff] %vm237, %v219
    %251 = vst.msk [vmem:[%s2 + $0x68] sm:$0xff] %vm237, %v224
    %252 = vst.msk [vmem:[%s2 + $0x70] sm:$0xff] %vm237, %v229
    %253 = vst.msk [vmem:[%s2 + $0x78] sm:$0xff] %vm237, %v234
    %270 = vrot.lane.b32.xlu0 %v159, 32
    %v271 = vpop.permute.xlu0 %270
    %272 = vrot.lane.b32.xlu0 %v164, 32
    %v273 = vpop.permute.xlu0 %272
    %274 = vrot.lane.b32.xlu0 %v169, 32
    %v275 = vpop.permute.xlu0 %274
    %276 = vrot.lane.b32.xlu0 %v174, 32
    %v277 = vpop.permute.xlu0 %276
    %278 = vrot.lane.b32.xlu0 %v179, 32
    %v279 = vpop.permute.xlu0 %278
    %280 = vrot.lane.b32.xlu0 %v184, 32
    %v281 = vpop.permute.xlu0 %280
    %282 = vrot.lane.b32.xlu0 %v189, 32
    %v283 = vpop.permute.xlu0 %282
    %284 = vrot.lane.b32.xlu0 %v194, 32
    %v285 = vpop.permute.xlu0 %284
    %286 = vrot.lane.b32.xlu0 %v199, 32
    %v287 = vpop.permute.xlu0 %286
    %288 = vrot.lane.b32.xlu0 %v204, 32
    %v289 = vpop.permute.xlu0 %288
    %290 = vrot.lane.b32.xlu0 %v209, 32
    %v291 = vpop.permute.xlu0 %290
    %292 = vrot.lane.b32.xlu0 %v214, 32
    %v293 = vpop.permute.xlu0 %292
    %294 = vrot.lane.b32.xlu0 %v219, 32
    %v295 = vpop.permute.xlu0 %294
    %296 = vrot.lane.b32.xlu0 %v224, 32
    %v297 = vpop.permute.xlu0 %296
    %298 = vrot.lane.b32.xlu0 %v229, 32
    %v299 = vpop.permute.xlu0 %298
    %300 = vrot.lane.b32.xlu0 %v234, 32
    %v301 = vpop.permute.xlu0 %300
    %vm318 = vcmask 523520
    %319 = vst.msk [vmem:[%s2] sm:$0xff] %vm318, %v271
    %320 = vst.msk [vmem:[%s2 + $0x8] sm:$0xff] %vm318, %v273
    %321 = vst.msk [vmem:[%s2 + $0x10] sm:$0xff] %vm318, %v275
    %322 = vst.msk [vmem:[%s2 + $0x18] sm:$0xff] %vm318, %v277
    %323 = vst.msk [vmem:[%s2 + $0x20] sm:$0xff] %vm318, %v279
    %324 = vst.msk [vmem:[%s2 + $0x28] sm:$0xff] %vm318, %v281
    %325 = vst.msk [vmem:[%s2 + $0x30] sm:$0xff] %vm318, %v283
    %326 = vst.msk [vmem:[%s2 + $0x38] sm:$0xff] %vm318, %v285
    %327 = vst.msk [vmem:[%s2 + $0x40] sm:$0xff] %vm318, %v287
    %328 = vst.msk [vmem:[%s2 + $0x48] sm:$0xff] %vm318, %v289
    %329 = vst.msk [vmem:[%s2 + $0x50] sm:$0xff] %vm318, %v291
    %330 = vst.msk [vmem:[%s2 + $0x58] sm:$0xff] %vm318, %v293
    %331 = vst.msk [vmem:[%s2 + $0x60] sm:$0xff] %vm318, %v295
    %332 = vst.msk [vmem:[%s2 + $0x68] sm:$0xff] %vm318, %v297
    %333 = vst.msk [vmem:[%s2 + $0x70] sm:$0xff] %vm318, %v299
    %334 = vst.msk [vmem:[%s2 + $0x78] sm:$0xff] %vm318, %v301
    // Predicated region
    $region14: #{my_upsample.1} parent=1 // pred_check
      _
    $region15: #{my_upsample.1} parent=1 // pred_check_branch
      %336 = sbr.rel (0) target = $region17
    $region16: #{my_upsample.1} parent=1 // pred_region
      _
    $region17: #{my_upsample.1} parent=1 // pred_fallthru
      _
    // Predicated region
    $region18: #{my_upsample.1} parent=1 // pred_check
      _
    $region19: #{my_upsample.1} parent=1 // pred_check_branch
      %338 = sbr.rel (0) target = $region21
    $region20: #{my_upsample.1} parent=1 // pred_region
      _
    $region21: #{my_upsample.1} parent=1 // pred_fallthru
      _
    %339 = vsyncpa [#allocation3], 1

</llo_original>
